<compile_context>
chip_gen: v6e
topology: v6e:2x2x1
jax: 0.10.0
libtpu: 0.0.40
codegen_flags: <defaults>
</compile_context>

<pallas_src>
import jax
import jax.numpy as jnp
from jax import lax
from jax.experimental import pallas as pl
from jax.experimental.pallas import tpu as pltpu


def _round_up(x, m):
    return ((x + m - 1) // m) * m


def _classifier_kernel(x_ref, scale_ref, shift_ref, w_ref, b_ref, o_ref, acc_ref):
    """One (bm, bn) output tile; K (in_features) is the innermost reduction axis."""
    k = pl.program_id(2)

    @pl.when(k == 0)
    def _():
        acc_ref[...] = jnp.zeros_like(acc_ref)

    # BatchNorm1d (eval): per-feature scale/shift, computed in f32 (v5e has no
    # bf16 VPU path, so explicit f32 math avoids pack/unpack churn).
    xn = (x_ref[...].astype(jnp.float32) * scale_ref[...].astype(jnp.float32)
          + shift_ref[...].astype(jnp.float32))

    # Dropout (eval) is the identity.

    # Linear: accumulate partial products over this K block on the MXU.
    acc_ref[...] += jnp.dot(xn.astype(w_ref.dtype), w_ref[...],
                            preferred_element_type=jnp.float32)

    @pl.when(k == pl.num_programs(2) - 1)
    def _():
        o_ref[...] = (acc_ref[...] + b_ref[...].astype(jnp.float32)).astype(o_ref.dtype)


def simple_classifiers_forward(x, *, gamma, beta, running_mean, running_var,
                               weight, bias, eps=1e-5, use_batchnorm=True):
    """Eval-mode forward of SimpleClassifiers.

    x      : (batch, in_features)
    weight : (n_classes, in_features)   (PyTorch nn.Linear layout)
    bias   : (n_classes,)
    gamma/beta/running_mean/running_var : (in_features,)
    """
    M, K = x.shape
    N = weight.shape[0]

    # Fold eval-mode BatchNorm1d into per-feature scale & shift (f32).
    if use_batchnorm:
        inv_std = lax.rsqrt(running_var.astype(jnp.float32) + jnp.float32(eps))
        scale = gamma.astype(jnp.float32) * inv_std
        shift = beta.astype(jnp.float32) - running_mean.astype(jnp.float32) * scale
    else:
        scale = jnp.ones((K,), jnp.float32)
        shift = jnp.zeros((K,), jnp.float32)

    w_t = weight.T  # (K, N): output tile is lane-dense over classes.

    # ---- dtype-aware block sizing -------------------------------------------------
    sub_m = {4: 8, 2: 16, 1: 32}.get(jnp.dtype(x.dtype).itemsize, 8)
    bm = _round_up(M, sub_m) if M <= 512 else 512      # rows per step
    bn = _round_up(N, 128) if N <= 512 else 512        # lane-dense output columns
    bk = _round_up(K, 128) if K <= 1024 else 1024      # reduction depth per step

    Mp, Np, Kp = _round_up(M, bm), _round_up(N, bn), _round_up(K, bk)

    # Zero-pad to block multiples (padded K contributes 0 to the matmul; padded
    # M rows / N cols are sliced off). Avoids degenerate 1-row blocks and keeps
    # the (8, 128)-divisibility rule satisfied on every BlockSpec.
    x_p = jnp.pad(x, ((0, Mp - M), (0, Kp - K)))
    w_p = jnp.pad(w_t, ((0, Kp - K), (0, Np - N)))
    scale_p = jnp.pad(scale, (0, Kp - K)).reshape(1, Kp)
    shift_p = jnp.pad(shift, (0, Kp - K)).reshape(1, Kp)
    bias_p = jnp.pad(bias.astype(jnp.float32), (0, Np - N)).reshape(1, Np)

    grid = (Mp // bm, Np // bn, Kp // bk)

    # ---- explicit scoped-VMEM budget (double-buffered inputs/outputs + scratch) ---
    isz_x = jnp.dtype(x.dtype).itemsize
    isz_w = jnp.dtype(w_p.dtype).itemsize
    block_bytes = (bm * bk * isz_x + bk * bn * isz_w + bm * bn * isz_x
                   + 2 * bk * 4 + bn * 4)
    vmem_bytes = int(min(56 * 2**20,                       # stay under v7x's 64 MiB
                         max(2 * block_bytes + bm * bn * 4 + (4 << 20),
                             32 * 2**20)))

    out_p = pl.pallas_call(
        _classifier_kernel,
        out_shape=jax.ShapeDtypeStruct((Mp, Np), x.dtype),
        grid_spec=pltpu.PrefetchScalarGridSpec(
            num_scalar_prefetch=0,
            grid=grid,
            in_specs=[
                pl.BlockSpec((bm, bk), lambda i, j, k: (i, k)),   # x tile
                pl.BlockSpec((1, bk), lambda i, j, k: (0, k)),    # BN scale slice
                pl.BlockSpec((1, bk), lambda i, j, k: (0, k)),    # BN shift slice
                pl.BlockSpec((bk, bn), lambda i, j, k: (k, j)),   # W^T tile
                pl.BlockSpec((1, bn), lambda i, j, k: (0, j)),    # bias slice
            ],
            out_specs=pl.BlockSpec((bm, bn), lambda i, j, k: (i, j)),
            scratch_shapes=[pltpu.VMEM((bm, bn), jnp.float32)],
        ),
        compiler_params=pltpu.CompilerParams(
            dimension_semantics=("parallel", "parallel", "arbitrary"),
            vmem_limit_bytes=vmem_bytes,
        ),
    )(x_p, scale_p, shift_p, w_p, bias_p)

    return out_p[:M, :N]


class SimpleClassifiersPallas:
    """JAX/Pallas analogue of torchwisdom SimpleClassifiers (eval-mode forward)."""

    def __init__(self, in_features, n_classes, use_batchnorm=True, use_dropout=True,
                 dprob=0.3, *, key, dtype=jnp.float32):
        k_w, k_b = jax.random.split(key)
        bound = 1.0 / (in_features ** 0.5)
        self.weight = jax.random.uniform(k_w, (n_classes, in_features), dtype, -bound, bound)
        self.bias = jax.random.uniform(k_b, (n_classes,), dtype, -bound, bound)
        self.gamma = jnp.ones((in_features,), dtype)
        self.beta = jnp.zeros((in_features,), dtype)
        self.running_mean = jnp.zeros((in_features,), dtype)
        self.running_var = jnp.ones((in_features,), dtype)
        self.use_batchnorm = use_batchnorm
        self.use_dropout = use_dropout   # eval-mode: Dropout is identity
        self.dprob = dprob
        self.eps = 1e-5

    def __call__(self, x):
        return simple_classifiers_forward(
            x,
            gamma=self.gamma, beta=self.beta,
            running_mean=self.running_mean, running_var=self.running_var,
            weight=self.weight, bias=self.bias,
            eps=self.eps, use_batchnorm=self.use_batchnorm,
        )


def _reference_forward(x, layer):
    """Plain-JAX eval-mode reference (mirrors the PyTorch module)."""
    if layer.use_batchnorm:
        inv = lax.rsqrt(layer.running_var.astype(jnp.float32) + jnp.float32(layer.eps))
        x = (x.astype(jnp.float32) - layer.running_mean) * inv * layer.gamma + layer.beta
    # Dropout (eval) is identity.
    return (x @ layer.weight.T.astype(jnp.float32) + layer.bias).astype(x.dtype)


if __name__ == "__main__":
    in_features, n_classes, batch = 32, 10, 8

    key = jax.random.PRNGKey(0)
    k_x, k_layer, k_g, k_be, k_m, k_v = jax.random.split(key, 6)

    x = jax.random.normal(k_x, (batch, in_features), jnp.float32)

    layer = SimpleClassifiersPallas(in_features, n_classes,
                                    use_batchnorm=True, use_dropout=True,
                                    dprob=0.3, key=k_layer)
    # Non-trivial BN statistics / affine so the check actually exercises the BN path.
    layer.gamma = jax.random.uniform(k_g, (in_features,), jnp.float32, 0.5, 1.5)
    layer.beta = 0.1 * jax.random.normal(k_be, (in_features,), jnp.float32)
    layer.running_mean = 0.2 * jax.random.normal(k_m, (in_features,), jnp.float32)
    layer.running_var = jax.random.uniform(k_v, (in_features,), jnp.float32, 0.5, 2.0)

    y = layer(x)
    y = jax.block_until_ready(y)

    y_ref = _reference_forward(x, layer)
    assert y.shape == (batch, n_classes) and y.dtype == x.dtype
    # Tolerance allows for MXU f32-pass vs XLA reference rounding differences.
    max_err = float(jnp.max(jnp.abs(y - y_ref)))
    assert jnp.allclose(y, y_ref, atol=5e-3, rtol=5e-3), f"mismatch vs reference (max |err|={max_err})"

    print("KERNEL_OK")
</pallas_src>

<mosaic_0001>
module attributes {stable_mosaic.version = 11 : i64} {
  func.func @_classifier_kernel(%arg0: i32, %arg1: i32, %arg2: i32, %arg3: memref<8x128xf32, #tpu.memory_space<vmem>>, %arg4: memref<1x128xf32, #tpu.memory_space<vmem>>, %arg5: memref<1x128xf32, #tpu.memory_space<vmem>>, %arg6: memref<128x128xf32, #tpu.memory_space<vmem>>, %arg7: memref<1x128xf32, #tpu.memory_space<vmem>>, %arg8: memref<8x128xf32, #tpu.memory_space<vmem>>, %arg9: memref<8x128xf32, #tpu.memory_space<vmem>>) attributes {dimension_semantics = [#tpu.dimension_semantics<parallel>, #tpu.dimension_semantics<parallel>, #tpu.dimension_semantics<arbitrary>], iteration_bounds = array<i64: 1, 1, 1>, scalar_prefetch = 0 : i64, scratch_operands = 1 : i64, tpu.core_type = #tpu.core_type<tc>, window_params = [{transform_indices = @transform_0, window_bounds = array<i64: 8, 128>}, {transform_indices = @transform_1, window_bounds = array<i64: 1, 128>}, {transform_indices = @transform_2, window_bounds = array<i64: 1, 128>}, {transform_indices = @transform_3, window_bounds = array<i64: 128, 128>}, {transform_indices = @transform_4, window_bounds = array<i64: 1, 128>}, {transform_indices = @transform_5, window_bounds = array<i64: 8, 128>}]} {
    %c0_i32 = arith.constant 0 : i32
    %0 = arith.cmpi eq, %arg2, %c0_i32 : i32
    %1 = arith.extui %0 : i1 to i32
    %c0_i32_0 = arith.constant 0 : i32
    %2 = arith.cmpi ne, %1, %c0_i32_0 : i32
    scf.if %2 {
      %cst_14 = arith.constant 0.000000e+00 : f32
      %18 = vector.broadcast %cst_14 : f32 to vector<8x128xf32>
      %c0_15 = arith.constant 0 : index
      %c0_16 = arith.constant 0 : index
      %19 = vector.load %arg9[%c0_15, %c0_16] : memref<8x128xf32, #tpu.memory_space<vmem>>, vector<8x128xf32>
      tpu.vector_store %arg9[%c0_15, %c0_16], %18 {strides = array<i32>} : memref<8x128xf32, #tpu.memory_space<vmem>>, vector<8x128xf32>,
    } else {
    }
    %c0 = arith.constant 0 : index
    %c0_1 = arith.constant 0 : index
    %3 = vector.load %arg3[%c0, %c0_1] : memref<8x128xf32, #tpu.memory_space<vmem>>, vector<8x128xf32>
    %c0_2 = arith.constant 0 : index
    %c0_3 = arith.constant 0 : index
    %4 = vector.load %arg4[%c0_2, %c0_3] : memref<1x128xf32, #tpu.memory_space<vmem>>, vector<1x128xf32>
    %5 = vector.broadcast %4 : vector<1x128xf32> to vector<8x128xf32>
    %6 = arith.mulf %3, %5 : vector<8x128xf32>
    %c0_4 = arith.constant 0 : index
    %c0_5 = arith.constant 0 : index
    %7 = vector.load %arg5[%c0_4, %c0_5] : memref<1x128xf32, #tpu.memory_space<vmem>>, vector<1x128xf32>
    %8 = vector.broadcast %7 : vector<1x128xf32> to vector<8x128xf32>
    %9 = arith.addf %6, %8 : vector<8x128xf32>
    %c0_6 = arith.constant 0 : index
    %c0_7 = arith.constant 0 : index
    %10 = vector.load %arg9[%c0_6, %c0_7] : memref<8x128xf32, #tpu.memory_space<vmem>>, vector<8x128xf32>
    %c0_8 = arith.constant 0 : index
    %c0_9 = arith.constant 0 : index
    %11 = vector.load %arg6[%c0_8, %c0_9] : memref<128x128xf32, #tpu.memory_space<vmem>>, vector<128x128xf32>
    %cst = arith.constant dense<0.000000e+00> : vector<8x128xf32>
    %12 = tpu.matmul %9, %11, %cst {dimension_numbers = #tpu.dot_dimension_numbers<[1], [0], [0], [1], [0, 0, 1, 1], [], []>} : vector<8x128xf32>, vector<128x128xf32>, vector<8x128xf32> -> vector<8x128xf32>
    %13 = arith.addf %10, %12 : vector<8x128xf32>
    %c0_10 = arith.constant 0 : index
    %c0_11 = arith.constant 0 : index
    %14 = vector.load %arg9[%c0_10, %c0_11] : memref<8x128xf32, #tpu.memory_space<vmem>>, vector<8x128xf32>
    tpu.vector_store %arg9[%c0_10, %c0_11], %13 {strides = array<i32>} : memref<8x128xf32, #tpu.memory_space<vmem>>, vector<8x128xf32>,
    %c0_i32_12 = arith.constant 0 : i32
    %15 = arith.cmpi eq, %arg2, %c0_i32_12 : i32
    %16 = arith.extui %15 : i1 to i32
    %c0_i32_13 = arith.constant 0 : i32
    %17 = arith.cmpi ne, %16, %c0_i32_13 : i32
    scf.if %17 {
      %c0_14 = arith.constant 0 : index
      %c0_15 = arith.constant 0 : index
      %18 = vector.load %arg9[%c0_14, %c0_15] : memref<8x128xf32, #tpu.memory_space<vmem>>, vector<8x128xf32>
      %c0_16 = arith.constant 0 : index
      %c0_17 = arith.constant 0 : index
      %19 = vector.load %arg7[%c0_16, %c0_17] : memref<1x128xf32, #tpu.memory_space<vmem>>, vector<1x128xf32>
      %20 = vector.broadcast %19 : vector<1x128xf32> to vector<8x128xf32>
      %21 = arith.addf %18, %20 : vector<8x128xf32>
      %c0_18 = arith.constant 0 : index
      %c0_19 = arith.constant 0 : index
      %22 = vector.load %arg8[%c0_18, %c0_19] : memref<8x128xf32, #tpu.memory_space<vmem>>, vector<8x128xf32>
      tpu.vector_store %arg8[%c0_18, %c0_19], %21 {strides = array<i32>} : memref<8x128xf32, #tpu.memory_space<vmem>>, vector<8x128xf32>,
    } else {
    }
    return
  }
  func.func @transform_0(%arg0: i32, %arg1: i32, %arg2: i32) -> (i32, i32) {
    %c0_i32 = arith.constant 0 : i32
    return %arg0, %arg2 : i32, i32
  }
  func.func @transform_1(%arg0: i32, %arg1: i32, %arg2: i32) -> (i32, i32) {
    %c0_i32 = arith.constant 0 : i32
    %c0_i32_0 = arith.constant 0 : i32
    return %c0_i32, %arg2 : i32, i32
  }
  func.func @transform_2(%arg0: i32, %arg1: i32, %arg2: i32) -> (i32, i32) {
    %c0_i32 = arith.constant 0 : i32
    %c0_i32_0 = arith.constant 0 : i32
    return %c0_i32, %arg2 : i32, i32
  }
  func.func @transform_3(%arg0: i32, %arg1: i32, %arg2: i32) -> (i32, i32) {
    %c0_i32 = arith.constant 0 : i32
    return %arg2, %arg1 : i32, i32
  }
  func.func @transform_4(%arg0: i32, %arg1: i32, %arg2: i32) -> (i32, i32) {
    %c0_i32 = arith.constant 0 : i32
    %c0_i32_0 = arith.constant 0 : i32
    return %c0_i32, %arg1 : i32, i32
  }
  func.func @transform_5(%arg0: i32, %arg1: i32, %arg2: i32) -> (i32, i32) {
    %c0_i32 = arith.constant 0 : i32
    return %arg0, %arg1 : i32, i32
  }
}

</mosaic_0001>

<llo_original>
// kernel: tpu_custom_call.1
$region0: #{tpu_custom_call.1}
  #allocation0 [shape = 'u32[]', space=smem, size = 0x4, offset = 0x4, fixed_abs, tag = 'smem constant byte address 0x4 - core index']
  #allocation1 [shape = 'u32[144,128]{1,0:T(1,128)}', space=vmem, size = 0x12000, scoped, tag = 'internal scratch']
  #allocation2 [shape = 'f32[8,128]{1,0:T(8,128)}', space=vmem, size = 0x1000, scoped, tag = 'scratch operand']
  %s0 = inlined_call_operand.hbm [shape: f32[8,128], index: 0, kind: input, shape index: {}]
  %s1 = inlined_call_operand.vmem [shape: f32[1,128], index: 1, kind: input, shape index: {}]
  %s2 = inlined_call_operand.vmem [shape: f32[1,128], index: 2, kind: input, shape index: {}]
  %s3 = inlined_call_operand.hbm [shape: f32[128,128], index: 3, kind: input, shape index: {}]
  %s4 = inlined_call_operand.vmem [shape: f32[1,128], index: 4, kind: input, shape index: {}]
  %s5 = inlined_call_operand.hbm [shape: f32[8,128], index: 5, kind: output, shape index: {}]
  %s6 = sld [smem:[#allocation0]]
  $region46: #{tpu_custom_call.1} parent=0
    _
  %s8 = ssub.s32 1, %s6
  %s9 = scalar_select 0, %s8, %s6
  $region1: #{tpu_custom_call.1} parent=0
    #allocation3 [shape = 'u8[4096]{0}', space=vmem, size = 0x1000, scoped, tag = 'input window, operand 0, single buffered']
    #allocation4 [shape = 's32[1]{0}', space=sflag, size = 0x4, scoped, tag = 'scoped memory for tpu_custom_call.1']
    #allocation5 [shape = 's32[1]{0}', space=sflag, size = 0x4, scoped, tag = 'scoped memory for tpu_custom_call.1']
    #allocation6 [shape = 'u8[65536]{0}', space=vmem, size = 0x10000, scoped, tag = 'input window, operand 3, single buffered']
    #allocation7 [shape = 's32[1]{0}', space=sflag, size = 0x4, scoped, tag = 'scoped memory for tpu_custom_call.1']
    #allocation8 [shape = 'u8[4096]{0}', space=vmem, size = 0x1000, scoped, tag = 'output window, operand 0, single buffered']
    %10 = vsyncpa [#allocation4], 0
    %11 = vsyncpa [#allocation7], 0
    %12 = vsyncpa [#allocation5], 0
    // Predicated region
    $region2: #{tpu_custom_call.1} parent=1 // pred_check
      _
    $region3: #{tpu_custom_call.1} parent=1 // pred_check_branch
      %14 = sbr.rel (0) target = $region5
    $region4: #{tpu_custom_call.1} parent=1 // pred_region
      %s16 = ssub.s32 128, 128
      %17 = vsyncadd [#allocation4], %s16
      %s19 = sshll.u32 [#allocation3], 4
      %s20 = int_to_ptr.vmem [resolvable:$true] %s19
      %22 = dma.hbm_to_vmem [thread:$0]  %s0, 128, %s20, [#allocation4]
    $region5: #{tpu_custom_call.1} parent=1 // pred_fallthru
      _
    // Predicated region
    $region6: #{tpu_custom_call.1} parent=1 // pred_check
      _
    $region7: #{tpu_custom_call.1} parent=1 // pred_check_branch
      %24 = sbr.rel (0) target = $region9
    $region8: #{tpu_custom_call.1} parent=1 // pred_region
      _
    $region9: #{tpu_custom_call.1} parent=1 // pred_fallthru
      _
    // Predicated region
    $region10: #{tpu_custom_call.1} parent=1 // pred_check
      _
    $region11: #{tpu_custom_call.1} parent=1 // pred_check_branch
      %26 = sbr.rel (0) target = $region13
    $region12: #{tpu_custom_call.1} parent=1 // pred_region
      _
    $region13: #{tpu_custom_call.1} parent=1 // pred_fallthru
      _
    // Predicated region
    $region14: #{tpu_custom_call.1} parent=1 // pred_check
      _
    $region15: #{tpu_custom_call.1} parent=1 // pred_check_branch
      %28 = sbr.rel (0) target = $region17
    $region16: #{tpu_custom_call.1} parent=1 // pred_region
      %s30 = ssub.s32 2048, 2048
      %31 = vsyncadd [#allocation7], %s30
      %s32 = sshll.u32 [#allocation6], 4
      %s33 = int_to_ptr.vmem [resolvable:$true] %s32
      %38 = dma.hbm_to_vmem [thread:$0]  %s3, 2048, %s33, [#allocation7], 128, 128, 8
    $region17: #{tpu_custom_call.1} parent=1 // pred_fallthru
      _
    // Predicated region
    $region18: #{tpu_custom_call.1} parent=1 // pred_check
      _
    $region19: #{tpu_custom_call.1} parent=1 // pred_check_branch
      %40 = sbr.rel (0) target = $region21
    $region20: #{tpu_custom_call.1} parent=1 // pred_region
      _
    $region21: #{tpu_custom_call.1} parent=1 // pred_fallthru
      _
    // Predicated region
    $region22: #{tpu_custom_call.1} parent=1 // pred_check
      _
    $region23: #{tpu_custom_call.1} parent=1 // pred_check_branch
      %42 = sbr.rel (0) target = $region25
    $region24: #{tpu_custom_call.1} parent=1 // pred_region
      %43 = dma.done [#allocation4], 128
    $region25: #{tpu_custom_call.1} parent=1 // pred_fallthru
      _
    // Predicated region
    $region26: #{tpu_custom_call.1} parent=1 // pred_check
      _
    $region27: #{tpu_custom_call.1} parent=1 // pred_check_branch
      %45 = sbr.rel (0) target = $region29
    $region28: #{tpu_custom_call.1} parent=1 // pred_region
      %46 = dma.done [#allocation7], 2048
    $region29: #{tpu_custom_call.1} parent=1 // pred_fallthru
      _
    %p47 = scmp.eq.s32.totalorder 0, 0
    // Predicated region
    $region30: #{tpu_custom_call.1} parent=1 // pred_check
      %p48 = pneg %p47
    $region31: #{tpu_custom_call.1} parent=1 // pred_check_branch
      %50 = sbr.rel (%p48) target = $region33
    $region32: #{tpu_custom_call.1} parent=1 // pred_region
      %51 = vst [vmem:[#allocation2] sm:$0xff] 0.0
    $region33: #{tpu_custom_call.1} parent=1 // pred_fallthru
      _
    %v52 = vld [vmem:[#allocation3] sm:$0xff]
    %v53 = vld [vmem:[%s1] sm:$0x1]
    %v55 = vlaneseq
    %v56 = vshrl.u32 %v55, 7
    %v57 = vsub.s32 0, %v56
    %v58 = vrot.slane %v53, %v57
    %v60 = vmul.f32 %v52, %v58
    %v61 = vld [vmem:[%s2] sm:$0x1]
    %v63 = vlaneseq
    %v64 = vshrl.u32 %v63, 7
    %v65 = vsub.s32 0, %v64
    %v66 = vrot.slane %v61, %v65
    %v68 = vadd.f32 %v60, %v66
    %v69 = vld [vmem:[#allocation2] sm:$0xff]
    %v70 = vld [vmem:[#allocation6] sm:$0xff]
    %v71 = vld [vmem:[#allocation6 + $0x8] sm:$0xff]
    %v72 = vld [vmem:[#allocation6 + $0x10] sm:$0xff]
    %v73 = vld [vmem:[#allocation6 + $0x18] sm:$0xff]
    %v74 = vld [vmem:[#allocation6 + $0x20] sm:$0xff]
    %v75 = vld [vmem:[#allocation6 + $0x28] sm:$0xff]
    %v76 = vld [vmem:[#allocation6 + $0x30] sm:$0xff]
    %v77 = vld [vmem:[#allocation6 + $0x38] sm:$0xff]
    %v78 = vld [vmem:[#allocation6 + $0x40] sm:$0xff]
    %v79 = vld [vmem:[#allocation6 + $0x48] sm:$0xff]
    %v80 = vld [vmem:[#allocation6 + $0x50] sm:$0xff]
    %v81 = vld [vmem:[#allocation6 + $0x58] sm:$0xff]
    %v82 = vld [vmem:[#allocation6 + $0x60] sm:$0xff]
    %v83 = vld [vmem:[#allocation6 + $0x68] sm:$0xff]
    %v84 = vld [vmem:[#allocation6 + $0x70] sm:$0xff]
    %v85 = vld [vmem:[#allocation6 + $0x78] sm:$0xff]
    %86 = vmatprep.subr.mxu0 0.0
    %87 = vmatpush1.msra.mxu0 %v85
    %88 = vmatprep.subr.mxu0 0.0
    %89 = vmatpush1.msra.mxu0 %v84
    %90 = vmatprep.subr.mxu0 0.0
    %91 = vmatpush1.msra.mxu0 %v83
    %92 = vmatprep.subr.mxu0 0.0
    %93 = vmatpush1.msra.mxu0 %v82
    %94 = vmatprep.subr.mxu0 0.0
    %95 = vmatpush1.msra.mxu0 %v81
    %96 = vmatprep.subr.mxu0 0.0
    %97 = vmatpush1.msra.mxu0 %v80
    %98 = vmatprep.subr.mxu0 0.0
    %99 = vmatpush1.msra.mxu0 %v79
    %100 = vmatprep.subr.mxu0 0.0
    %101 = vmatpush1.msra.mxu0 %v78
    %102 = vmatprep.subr.mxu0 0.0
    %103 = vmatpush1.msra.mxu0 %v77
    %104 = vmatprep.subr.mxu0 0.0
    %105 = vmatpush1.msra.mxu0 %v76
    %106 = vmatprep.subr.mxu0 0.0
    %107 = vmatpush1.msra.mxu0 %v75
    %108 = vmatprep.subr.mxu0 0.0
    %109 = vmatpush1.msra.mxu0 %v74
    %110 = vmatprep.subr.mxu0 0.0
    %111 = vmatpush1.msra.mxu0 %v73
    %112 = vmatprep.subr.mxu0 0.0
    %113 = vmatpush1.msra.mxu0 %v72
    %114 = vmatprep.subr.mxu0 0.0
    %115 = vmatpush1.msra.mxu0 %v71
    %116 = vmatprep.subr.mxu0 0.0
    %117 = vmatpush1.msra.mxu0 %v70
    %118 = vmatprep.subr.mxu0 0.0
    %119 = vmatpush2.msra.mxu0 0.0
    %120 = vmatprep.subr.mxu0 0.0
    %121 = vmatpush2.msra.mxu0 0.0
    %122 = vmatprep.subr.mxu0 0.0
    %123 = vmatpush2.msra.mxu0 0.0
    %124 = vmatprep.subr.mxu0 0.0
    %125 = vmatpush2.msra.mxu0 0.0
    %126 = vmatprep.subr.mxu0 0.0
    %127 = vmatpush2.msra.mxu0 0.0
    %128 = vmatprep.subr.mxu0 0.0
    %129 = vmatpush2.msra.mxu0 0.0
    %130 = vmatprep.subr.mxu0 0.0
    %131 = vmatpush2.msra.mxu0 0.0
    %132 = vmatprep.subr.mxu0 0.0
    %133 = vmatpush2.msra.mxu0 0.0
    %134 = vmatprep.subr.mxu0 0.0
    %135 = vmatpush2.msra.mxu0 0.0
    %136 = vmatprep.subr.mxu0 0.0
    %137 = vmatpush2.msra.mxu0 0.0
    %138 = vmatprep.subr.mxu0 0.0
    %139 = vmatpush2.msra.mxu0 0.0
    %140 = vmatprep.subr.mxu0 0.0
    %141 = vmatpush2.msra.mxu0 0.0
    %142 = vmatprep.subr.mxu0 0.0
    %143 = vmatpush2.msra.mxu0 0.0
    %144 = vmatprep.subr.mxu0 0.0
    %145 = vmatpush2.msra.mxu0 0.0
    %146 = vmatprep.subr.mxu0 0.0
    %147 = vmatpush2.msra.mxu0 0.0
    %148 = vmatprep.subr.mxu0 0.0
    %149 = vmatpush2.msra.mxu0 0.0
    %150 = vmatprep.mubr.f32.mxu0 0.0
    %151 = vmatmul.mubr.f32.gmra.mxu0 %v68
    %v152 = vpop.f32.mrf.mxu0
    %v153 = vadd.f32 0.0, %v152
    %v154 = vpop.f32.mrf.mxu0
    %155 = vdwg.mxu0
    %v156 = vadd.f32 %v69, %v153
    %157 = vst [vmem:[#allocation2] sm:$0xff] %v156
    // Predicated region
    $region34: #{tpu_custom_call.1} parent=1 // pred_check
      %p158 = pneg %p47
    $region35: #{tpu_custom_call.1} parent=1 // pred_check_branch
      %160 = sbr.rel (%p158) target = $region37
    $region36: #{tpu_custom_call.1} parent=1 // pred_region
      %v161 = vld [vmem:[#allocation2] sm:$0xff]
      %v162 = vld [vmem:[%s4] sm:$0x1]
      %v164 = vlaneseq
      %v165 = vshrl.u32 %v164, 7
      %v166 = vsub.s32 0, %v165
      %v167 = vrot.slane %v162, %v166
      %v169 = vadd.f32 %v161, %v167
      %170 = vst [vmem:[#allocation8] sm:$0xff] %v169
    $region37: #{tpu_custom_call.1} parent=1 // pred_fallthru
      _
    // Predicated region
    $region38: #{tpu_custom_call.1} parent=1 // pred_check
      _
    $region39: #{tpu_custom_call.1} parent=1 // pred_check_branch
      %172 = sbr.rel (0) target = $region41
    $region40: #{tpu_custom_call.1} parent=1 // pred_region
      %s174 = ssub.s32 128, 128
      %175 = vsyncadd [#allocation5], %s174
      %s177 = sshll.u32 [#allocation8], 4
      %s178 = int_to_ptr.vmem [resolvable:$true] %s177
      %180 = dma.vmem_to_hbm [thread:$0]  %s178, 128, %s5, [#allocation5]
    $region41: #{tpu_custom_call.1} parent=1 // pred_fallthru
      _
    // Predicated region
    $region42: #{tpu_custom_call.1} parent=1 // pred_check
      _
    $region43: #{tpu_custom_call.1} parent=1 // pred_check_branch
      %182 = sbr.rel (0) target = $region45
    $region44: #{tpu_custom_call.1} parent=1 // pred_region
      %183 = dma.done [#allocation5], 128
    $region45: #{tpu_custom_call.1} parent=1 // pred_fallthru
      _
    %184 = vsyncpa [#allocation4], 1
    %185 = vsyncpa [#allocation7], 1
    %186 = vsyncpa [#allocation5], 1

</llo_original>
